<compile_context>
chip_gen: v6e
topology: v6e:2x2x1
jax: 0.10.0
libtpu: 0.0.40
codegen_flags: <defaults>
</compile_context>

<pallas_src>
import functools

import jax
import jax.numpy as jnp
from jax.experimental import pallas as pl
from jax.experimental.pallas import tpu as pltpu

HIDDEN = 100        # logical hidden width of the module
HIDDEN_PAD = 128    # lane-dense padded hidden width (padded lanes hold zeros)
SUBLANE = 8         # batch (M) padding so the MXU LHS is sublane-dense
ROW_ALIGN = 512     # W1^T row-tile granularity (multiple of the 128-lane x stream)
TILE_CAP = 32768    # max rows of W1^T per grid step (8 MiB bf16; ~16 MiB dbl-buffered)
NUM_SHARDS = 2      # reduction shards on the "parallel" axis (both TCs on v7x)


def _round_up(x, m):
    return ((x + m - 1) // m) * m


def _cdiv(a, b):
    return (a + b - 1) // b


def _plan_tiling(n, tile_cap=TILE_CAP, num_shards=NUM_SHARDS):
    """Split the contraction dim N into num_shards x k_per_shard tiles of tk rows.

    tk is derived from the padded per-shard length (not a fixed power of two) so an
    awkward N never streams a whole extra all-zero tile — at most a <ROW_ALIGN sliver.
    """
    n_min = _round_up(max(n, 1), ROW_ALIGN)
    if n_min < num_shards * ROW_ALIGN:
        num_shards = 1                     # too small to split across cores
    shard_len = _round_up(_cdiv(n_min, num_shards), ROW_ALIGN)
    k_per_shard = _cdiv(shard_len, tile_cap)
    tk = _round_up(_cdiv(shard_len, k_per_shard), ROW_ALIGN)
    n_pad = num_shards * k_per_shard * tk
    return {"n": int(n), "n_pad": int(n_pad), "tk": int(tk),
            "k_per_shard": int(k_per_shard), "num_shards": int(num_shards)}


def prepare_params(raw, n, tile_cap=TILE_CAP, num_shards=NUM_SHARDS):
    """Pad / transpose / cast nn.Linear-layout params for the kernel.

    raw: {"w1": (100, N) f32, "b1": (100,) f32, "w2": (1, 100) f32, "b2": (1,) f32}
    Zero padding of W1^T rows/lanes is what keeps the padded reduction exact.
    """
    cfg = _plan_tiling(n, tile_cap, num_shards)
    n_pad = cfg["n_pad"]

    w1t = jnp.zeros((n_pad, HIDDEN_PAD), jnp.bfloat16)
    w1t = w1t.at[:n, :HIDDEN].set(
        jnp.asarray(raw["w1"], jnp.float32).T.astype(jnp.bfloat16))
    b1 = jnp.zeros((HIDDEN_PAD,), jnp.float32).at[:HIDDEN].set(
        jnp.asarray(raw["b1"], jnp.float32))
    w2row = jnp.zeros((HIDDEN_PAD,), jnp.float32).at[:HIDDEN].set(
        jnp.asarray(raw["w2"], jnp.float32).reshape(-1))
    b2 = jnp.asarray(raw["b2"], jnp.float32).reshape(())

    params = {"w1t": w1t, "b1": b1, "w2row": w2row, "b2": b2}
    return params, cfg


def _w1_stream_kernel(x_ref, w1t_ref, out_ref):
    # x_ref:   (B_pad, TK)            bf16  streamed slice of the flattened inputs
    # w1t_ref: (TK, HIDDEN_PAD)       bf16  streamed slice of W1^T (zero padded)
    # out_ref: (1, B_pad, HIDDEN_PAD) f32   per-shard partial pre-activation,
    #                                       resident across the reduction axis k.
    k = pl.program_id(1)

    @pl.when(k == 0)
    def _init():
        out_ref[...] = jnp.zeros_like(out_ref)

    out_ref[...] += jnp.dot(
        x_ref[...], w1t_ref[...], preferred_element_type=jnp.float32
    )[None, :, :]


def _partial_preactivations(x_pad, w1t, cfg):
    """x_pad: (B_pad, n_pad) bf16 -> (num_shards, B_pad, HIDDEN_PAD) f32 partials."""
    b_pad = x_pad.shape[0]
    tk, kps, ns = cfg["tk"], cfg["k_per_shard"], cfg["num_shards"]

    # Double-buffered W1^T + x streams plus the resident per-shard output blocks.
    vmem_needed = (2 * tk * HIDDEN_PAD * 2          # W1^T tiles (bf16, x2 buffers)
                   + 2 * b_pad * tk * 2             # x tiles    (bf16, x2 buffers)
                   + ns * b_pad * HIDDEN_PAD * 4)   # output accumulators (f32)
    vmem_limit = int(min(max(2 * vmem_needed, 16 << 20), 48 << 20))

    return pl.pallas_call(
        _w1_stream_kernel,
        out_shape=jax.ShapeDtypeStruct((ns, b_pad, HIDDEN_PAD), jnp.float32),
        grid_spec=pltpu.PrefetchScalarGridSpec(
            num_scalar_prefetch=0,
            grid=(ns, kps),                                    # (shards, reduction)
            in_specs=[
                pl.BlockSpec((b_pad, tk), lambda c, k: (0, c * kps + k)),        # x
                pl.BlockSpec((tk, HIDDEN_PAD), lambda c, k: (c * kps + k, 0)),   # W1^T
            ],
            out_specs=pl.BlockSpec((1, b_pad, HIDDEN_PAD), lambda c, k: (c, 0, 0)),
        ),
        compiler_params=pltpu.CompilerParams(
            dimension_semantics=("parallel", "arbitrary"),
            vmem_limit_bytes=vmem_limit,
        ),
    )(x_pad, w1t)


def _forward_batch_impl(x_batch, params, cfg, apply_sigmoid=True):
    """x_batch: (B, *shape_targets) -> (B,) discriminator decisions."""
    b = x_batch.shape[0]
    n, n_pad = cfg["n"], cfg["n_pad"]
    x = x_batch.reshape(b, -1).astype(jnp.bfloat16)
    b_pad = _round_up(max(b, 1), SUBLANE)
    x = jnp.pad(x, ((0, b_pad - b), (0, n_pad - n)))

    partial = _partial_preactivations(x, params["w1t"], cfg)   # (S, B_pad, 128) f32
    pre = jnp.sum(partial, axis=0)[:b]                         # (B, 128) f32

    # Tiny epilogue in plain XLA: bias + LeakyReLU(0.2) + Linear(100,1) [+ sigmoid].
    # Padded lanes are exactly zero in b1/w2row, so they contribute nothing.
    h = pre + params["b1"]
    h = jnp.where(h >= 0.0, h, 0.2 * h)
    d = h @ params["w2row"] + params["b2"]                     # (B,)
    if apply_sigmoid:                                          # base_loss == "minimax"
        d = jax.nn.sigmoid(d)
    return d
    # TODO(synk): use_auxiliary head (Linear(100, num_classes) on h) not instantiated
    # (module default use_auxiliary=False); use_attention is forced False in the module.


def make_forward(params, cfg, base_loss="minimax"):
    """jit-wrapped batched forward: (B, *shape_targets) -> (B,) decisions."""
    apply_sigmoid = (base_loss == "minimax")
    return jax.jit(functools.partial(
        _forward_batch_impl, params=params, cfg=cfg, apply_sigmoid=apply_sigmoid))


def linear_discriminator_forward(inputs, forward_fn):
    """Module-equivalent forward for a single (C, W, H) tensor -> {"discriminated": (1,)}."""
    d = forward_fn(inputs[None])
    return {"discriminated": d.reshape(-1)}


def reference_forward_batch(x_batch, params, cfg, apply_sigmoid=True):
    """Pure-JAX reference using the same padded bf16 params (f32 accumulation)."""
    b = x_batch.shape[0]
    n, n_pad = cfg["n"], cfg["n_pad"]
    x = x_batch.reshape(b, -1).astype(jnp.bfloat16)
    x = jnp.pad(x, ((0, 0), (0, n_pad - n)))
    pre = jnp.dot(x, params["w1t"], preferred_element_type=jnp.float32)
    h = pre + params["b1"]
    h = jnp.where(h >= 0.0, h, 0.2 * h)
    d = h @ params["w2row"] + params["b2"]
    return jax.nn.sigmoid(d) if apply_sigmoid else d


if __name__ == "__main__":
    shape_targets = (4, 16, 16)     # C, W, H  -> N = 1024 (small demo size)
    batch = 2
    n = int(shape_targets[0] * shape_targets[1] * shape_targets[2])

    key = jax.random.PRNGKey(0)
    k_in, k1, k2, k3, k4 = jax.random.split(key, 5)

    x_batch = jax.random.normal(k_in, (batch,) + shape_targets, jnp.float32)
    raw = {
        "w1": jax.random.normal(k1, (HIDDEN, n), jnp.float32) * 0.02,
        "b1": jax.random.normal(k2, (HIDDEN,), jnp.float32) * 0.02,
        "w2": jax.random.normal(k3, (1, HIDDEN), jnp.float32) * 0.02,
        "b2": jax.random.normal(k4, (1,), jnp.float32) * 0.02,
    }
    params, cfg = prepare_params(raw, n)
    forward_fn = make_forward(params, cfg)

    # Batched path: every streamed W1 byte is reused `batch` times.
    d_batch = jax.block_until_ready(forward_fn(x_batch))
    ref_batch = reference_forward_batch(x_batch, params, cfg)
    assert d_batch.shape == (batch,), d_batch.shape
    assert jnp.allclose(d_batch, ref_batch, atol=1e-4, rtol=1e-4), (d_batch, ref_batch)

    # Module-equivalent single-image path: forward(inputs)["discriminated"] has shape (1,).
    out = linear_discriminator_forward(x_batch[0], forward_fn)
    disc = jax.block_until_ready(out["discriminated"])
    assert disc.shape == (1,), disc.shape
    assert jnp.allclose(disc, ref_batch[:1], atol=1e-4, rtol=1e-4), (disc, ref_batch[:1])

    print("KERNEL_OK")
</pallas_src>

<mosaic_0001>
module attributes {stable_mosaic.version = 11 : i64} {
  func.func @_w1_stream_kernel(%arg0: i32, %arg1: i32, %arg2: memref<8x512xbf16, #tpu.memory_space<vmem>>, %arg3: memref<512x128xbf16, #tpu.memory_space<vmem>>, %arg4: memref<1x8x128xf32, #tpu.memory_space<vmem>>) attributes {dimension_semantics = [#tpu.dimension_semantics<parallel>, #tpu.dimension_semantics<arbitrary>], iteration_bounds = array<i64: 2, 1>, scalar_prefetch = 0 : i64, scratch_operands = 0 : i64, tpu.core_type = #tpu.core_type<tc>, window_params = [{transform_indices = @transform_0, window_bounds = array<i64: 8, 512>}, {transform_indices = @transform_1, window_bounds = array<i64: 512, 128>}, {transform_indices = @transform_2, window_bounds = array<i64: 1, 8, 128>}]} {
    %c0_i32 = arith.constant 0 : i32
    %0 = arith.cmpi eq, %arg1, %c0_i32 : i32
    %1 = arith.extui %0 : i1 to i32
    %c0_i32_0 = arith.constant 0 : i32
    %2 = arith.cmpi ne, %1, %c0_i32_0 : i32
    scf.if %2 {
      %cst_10 = arith.constant 0.000000e+00 : f32
      %10 = vector.broadcast %cst_10 : f32 to vector<1x8x128xf32>
      %c0_11 = arith.constant 0 : index
      %c0_12 = arith.constant 0 : index
      %c0_13 = arith.constant 0 : index
      %11 = vector.load %arg4[%c0_11, %c0_12, %c0_13] : memref<1x8x128xf32, #tpu.memory_space<vmem>>, vector<1x8x128xf32>
      tpu.vector_store %arg4[%c0_11, %c0_12, %c0_13], %10 {strides = array<i32>} : memref<1x8x128xf32, #tpu.memory_space<vmem>>, vector<1x8x128xf32>,
    } else {
    }
    %c0 = arith.constant 0 : index
    %c0_1 = arith.constant 0 : index
    %c0_2 = arith.constant 0 : index
    %3 = vector.load %arg4[%c0, %c0_1, %c0_2] : memref<1x8x128xf32, #tpu.memory_space<vmem>>, vector<1x8x128xf32>
    %c0_3 = arith.constant 0 : index
    %c0_4 = arith.constant 0 : index
    %4 = vector.load %arg2[%c0_3, %c0_4] : memref<8x512xbf16, #tpu.memory_space<vmem>>, vector<8x512xbf16>
    %c0_5 = arith.constant 0 : index
    %c0_6 = arith.constant 0 : index
    %5 = vector.load %arg3[%c0_5, %c0_6] : memref<512x128xbf16, #tpu.memory_space<vmem>>, vector<512x128xbf16>
    %cst = arith.constant dense<0.000000e+00> : vector<8x128xf32>
    %6 = tpu.matmul %4, %5, %cst {dimension_numbers = #tpu.dot_dimension_numbers<[1], [0], [0], [1], [0, 0, 1, 1], [], []>} : vector<8x512xbf16>, vector<512x128xbf16>, vector<8x128xf32> -> vector<8x128xf32>
    %7 = vector.shape_cast %6 : vector<8x128xf32> to vector<1x8x128xf32>
    %8 = arith.addf %3, %7 : vector<1x8x128xf32>
    %c0_7 = arith.constant 0 : index
    %c0_8 = arith.constant 0 : index
    %c0_9 = arith.constant 0 : index
    %9 = vector.load %arg4[%c0_7, %c0_8, %c0_9] : memref<1x8x128xf32, #tpu.memory_space<vmem>>, vector<1x8x128xf32>
    tpu.vector_store %arg4[%c0_7, %c0_8, %c0_9], %8 {strides = array<i32>} : memref<1x8x128xf32, #tpu.memory_space<vmem>>, vector<1x8x128xf32>,
    return
  }
  func.func @transform_0(%arg0: i32, %arg1: i32) -> (i32, i32) {
    %c1_i32 = arith.constant 1 : i32
    %0 = arith.muli %arg0, %c1_i32 : i32
    %1 = arith.addi %0, %arg1 : i32
    %c0_i32 = arith.constant 0 : i32
    %c0_i32_0 = arith.constant 0 : i32
    return %c0_i32, %1 : i32, i32
  }
  func.func @transform_1(%arg0: i32, %arg1: i32) -> (i32, i32) {
    %c1_i32 = arith.constant 1 : i32
    %0 = arith.muli %arg0, %c1_i32 : i32
    %1 = arith.addi %0, %arg1 : i32
    %c0_i32 = arith.constant 0 : i32
    %c0_i32_0 = arith.constant 0 : i32
    return %1, %c0_i32 : i32, i32
  }
  func.func @transform_2(%arg0: i32, %arg1: i32) -> (i32, i32, i32) {
    %c0_i32 = arith.constant 0 : i32
    %c0_i32_0 = arith.constant 0 : i32
    %c0_i32_1 = arith.constant 0 : i32
    return %arg0, %c0_i32, %c0_i32_0 : i32, i32, i32
  }
}

</mosaic_0001>

<llo_original>
// kernel: _forward_batch_impl.1
$region0: #{_forward_batch_impl.1}
  #allocation0 [shape = 'u32[]', space=smem, size = 0x4, offset = 0x4, fixed_abs, tag = 'smem constant byte address 0x4 - core index']
  #allocation1 [shape = 'u32[144,128]{1,0:T(1,128)}', space=vmem, size = 0x12000, scoped, tag = 'internal scratch']
  %s0 = inlined_call_operand.vmem [shape: bf16[8,1024], index: 0, kind: input, shape index: {}]
  %s1 = inlined_call_operand.hbm [shape: bf16[1024,128], index: 1, kind: input, shape index: {}]
  %s2 = inlined_call_operand.vmem [shape: f32[2,8,128], index: 2, kind: output, shape index: {}]
  %s3 = sld [smem:[#allocation0]]
  $region49: #{_forward_batch_impl.1} parent=0
    _
  %s5 = ssub.s32 1, %s3
  %s6 = scalar_select 0, %s5, %s3
  $region1: #{_forward_batch_impl.1} parent=0
    #allocation2 [shape = 'u8[262144]{0}', space=vmem, size = 0x40000, scoped, tag = 'input window, operand 1']
    #allocation3 [shape = 's32[2]{0}', space=sflag, size = 0x8, scoped, tag = 'scoped memory for _forward_batch_impl.1']
    %7 = vsyncpa [#allocation3], 0
    %s8 = scalar_lea.sflag [#allocation3], 1
    %9 = vsyncpa %s8, 0
    loop: start=0, step=1, limit=4
    $region2: #{_forward_batch_impl.1} parent=1 // loop_pre_header
      _
    $region3: #{_forward_batch_impl.1} parent=1 // loop_header
      %s11 = sphi 0, %s15
      %p12 = scmp.ge.s32.totalorder %s11, 4
      %s18 = sphi 0, %s30
      %s19 = sphi 0, %s26
      %s20 = sphi 0, %s18
      %s21 = sphi 0, %s19
      %s22 = sphi 0, %s20
      %s23 = sphi 0, %s21
      %s35 = sphi 0, %s37
      %s38 = sphi 0, %s35
      %s39 = sphi 0, %s38
      %s55 = sphi 0, %s39
      %s63 = sphi 0, %s65
      %s66 = sphi 0, %s63
      %s67 = sphi 0, %s66
      %s83 = sphi 0, %s67
      %s89 = sphi 0, %s91
      %s92 = sphi 0, %s89
      %s93 = sphi 0, %s92
      %s109 = sphi 0, %s93
    $region4: #{_forward_batch_impl.1} parent=1 // loop_header_branch
      %14 = sbr.rel (%p12) target = $region8
    $region5: #{_forward_batch_impl.1} parent=1 // loop_body
      %s16 = ssub.s32 %s11, 1
      %s17 = ssub.s32 %s11, 2
      %s24 = sadd.s32 1, %s19
      %p25 = scmp.ge.s32.totalorder %s24, 1
      %s26 = scalar_select %p25, 0, %s24
      %s27 = sadd.s32 1, %s18
      %s28 = scalar_select %p25, %s27, %s18
      %p29 = scmp.ge.s32.totalorder %s28, 2
      %s30 = scalar_select %p29, 0, %s28
      %s31 = sadd.s32 %s18, %s19
      %s32 = sadd.s32 %s30, %s26
      %s33 = ssub.s32 %s31, %s32
      %p34 = scmp.eq.s32.totalorder %s33, 0
      %s36 = sadd.s32 %s35, 1
      %s37 = scalar_select %p34, %s35, %s36
      %p40 = pneg %p34
      %p41 = scmp.eq.s32.totalorder %s11, 1
      %p42 = por %p40, %p41
      %p43 = scmp.ne.s32.totalorder %s35, %s38
      %p44 = scmp.eq.s32.totalorder %s11, 0
      %p45 = por %p43, %p44
      %p46 = scmp.ne.s32.totalorder %s35, %s38
      %p47 = scmp.eq.s32.totalorder %s16, 1
      %p48 = por %p46, %p47
      %p49 = scmp.ne.s32.totalorder %s38, %s39
      %p50 = scmp.eq.s32.totalorder %s16, 0
      %p51 = por %p49, %p50
      %p52 = scmp.ne.s32.totalorder %s38, %s39
      %p53 = scmp.eq.s32.totalorder %s17, 1
      %p54 = por %p52, %p53
      %p56 = scmp.ne.s32.totalorder %s39, %s55
      %p57 = scmp.eq.s32.totalorder %s17, 0
      %p58 = por %p56, %p57
      %s59 = sadd.s32 %s18, %s19
      %s60 = sadd.s32 %s30, %s26
      %s61 = ssub.s32 %s59, %s60
      %p62 = scmp.eq.s32.totalorder %s61, 0
      %s64 = sadd.s32 %s63, 1
      %s65 = scalar_select %p62, %s63, %s64
      %p68 = pneg %p62
      %p69 = scmp.eq.s32.totalorder %s11, 1
      %p70 = por %p68, %p69
      %p71 = scmp.ne.s32.totalorder %s63, %s66
      %p72 = scmp.eq.s32.totalorder %s11, 0
      %p73 = por %p71, %p72
      %p74 = scmp.ne.s32.totalorder %s63, %s66
      %p75 = scmp.eq.s32.totalorder %s16, 1
      %p76 = por %p74, %p75
      %p77 = scmp.ne.s32.totalorder %s66, %s67
      %p78 = scmp.eq.s32.totalorder %s16, 0
      %p79 = por %p77, %p78
      %p80 = scmp.ne.s32.totalorder %s66, %s67
      %p81 = scmp.eq.s32.totalorder %s17, 1
      %p82 = por %p80, %p81
      %p84 = scmp.ne.s32.totalorder %s67, %s83
      %p85 = scmp.eq.s32.totalorder %s17, 0
      %p86 = por %p84, %p85
      %s87 = ssub.s32 %s18, %s30
      %p88 = scmp.eq.s32.totalorder %s87, 0
      %s90 = sadd.s32 %s89, 1
      %s91 = scalar_select %p88, %s89, %s90
      %p94 = pneg %p88
      %p95 = scmp.eq.s32.totalorder %s11, 1
      %p96 = por %p94, %p95
      %p97 = scmp.ne.s32.totalorder %s89, %s92
      %p98 = scmp.eq.s32.totalorder %s11, 0
      %p99 = por %p97, %p98
      %p100 = scmp.ne.s32.totalorder %s89, %s92
      %p101 = scmp.eq.s32.totalorder %s16, 1
      %p102 = por %p100, %p101
      %p103 = scmp.ne.s32.totalorder %s92, %s93
      %p104 = scmp.eq.s32.totalorder %s16, 0
      %p105 = por %p103, %p104
      %p106 = scmp.ne.s32.totalorder %s92, %s93
      %p107 = scmp.eq.s32.totalorder %s17, 1
      %p108 = por %p106, %p107
      %p110 = scmp.ne.s32.totalorder %s93, %s109
      %p111 = scmp.eq.s32.totalorder %s17, 0
      %p112 = por %p110, %p111
      %p113 = scmp.le.s32.totalorder 1, %s11
      %p114 = scmp.lt.s32.totalorder %s11, 3
      %p115 = pnand %p113, %p114
      %p116 = pneg %p115
      // Predicated region
      $region9: #{_forward_batch_impl.1} parent=5 // pred_check
        _
      $region10: #{_forward_batch_impl.1} parent=5 // pred_check_branch
        %118 = sbr.rel (%p115) target = $region12
      $region11: #{_forward_batch_impl.1} parent=5 // pred_region
        %s119 = ssub.s32 %s11, 1
      $region12: #{_forward_batch_impl.1} parent=5 // pred_fallthru
        _
      %p120 = scmp.lt.s32.totalorder %s11, 2
      // Predicated region
      $region13: #{_forward_batch_impl.1} parent=5 // pred_check
        %p121 = pneg %p120
      $region14: #{_forward_batch_impl.1} parent=5 // pred_check_branch
        %123 = sbr.rel (%p121) target = $region16
      $region15: #{_forward_batch_impl.1} parent=5 // pred_region
        // Predicated region
        $region17: #{_forward_batch_impl.1} parent=15 // pred_check
          %p124 = pneg %p45
        $region18: #{_forward_batch_impl.1} parent=15 // pred_check_branch
          %126 = sbr.rel (%p124) target = $region20
        $region19: #{_forward_batch_impl.1} parent=15 // pred_region
          %s127 = sadd.s32 %s18, %s19
          %s128 = smul.u32 4, %s127
          %p129 = scmp.lt.s32.totalorder %s128, 7
          %s130 = scalar_select %p129, %s128, 7
          %s131 = smul.addr %s130, 4
          %s132 = scalar_lea.vmem %s0, %s131
          %s133 = sadd.s32 %s18, %s19
          %s134 = smul.u32 4, %s133
        $region20: #{_forward_batch_impl.1} parent=15 // pred_fallthru
          _
        // Predicated region
        $region21: #{_forward_batch_impl.1} parent=15 // pred_check
          %p135 = pneg %p73
        $region22: #{_forward_batch_impl.1} parent=15 // pred_check_branch
          %137 = sbr.rel (%p135) target = $region24
        $region23: #{_forward_batch_impl.1} parent=15 // pred_region
          %s138 = sand.u32 %s63, 1
          %s139 = scalar_lea.sflag [#allocation3], %s138
          %s140 = sand.u32 %s63, 1
          %s141 = smul.addr %s140, 256
          %s142 = scalar_lea.vmem [#allocation2], %s141
          %s143 = sadd.s32 %s18, %s19
          %s144 = smul.u32 64, %s143
          %s146 = ssub.s32 4096, 4096
          %147 = vsyncadd %s139, %s146
          %s148 = smul.addr %s144, 64
          %s149 = scalar_lea.hbm %s1, %s148
          %s150 = sshll.u32 %s142, 4
          %s151 = int_to_ptr.vmem [resolvable:$true] %s150
          %156 = dma.hbm_to_vmem [thread:$0]  %s149, 4096, %s151, %s139, 64, 64, 4
        $region24: #{_forward_batch_impl.1} parent=15 // pred_fallthru
          _
      $region16: #{_forward_batch_impl.1} parent=5 // pred_fallthru
        _
      %p157 = scmp.le.s32.totalorder 1, %s11
      %p158 = scmp.lt.s32.totalorder %s11, 3
      %p159 = pnand %p157, %p158
      %p160 = pneg %p159
      // Predicated region
      $region25: #{_forward_batch_impl.1} parent=5 // pred_check
        _
      $region26: #{_forward_batch_impl.1} parent=5 // pred_check_branch
        %162 = sbr.rel (%p159) target = $region28
      $region27: #{_forward_batch_impl.1} parent=5 // pred_region
        %s163 = ssub.s32 %s11, 1
        %s164 = sand.u32 %s66, 1
        %s165 = scalar_lea.sflag [#allocation3], %s164
        %s166 = sand.u32 %s66, 1
        %s167 = smul.addr %s166, 256
        %s168 = scalar_lea.vmem [#allocation2], %s167
        // Predicated region
        $region29: #{_forward_batch_impl.1} parent=27 // pred_check
          %p169 = pneg %p79
        $region30: #{_forward_batch_impl.1} parent=27 // pred_check_branch
          %171 = sbr.rel (%p169) target = $region32
        $region31: #{_forward_batch_impl.1} parent=27 // pred_region
          %172 = dma.done %s165, 4096
        $region32: #{_forward_batch_impl.1} parent=27 // pred_fallthru
          _
        %s173 = sadd.s32 %s20, %s21
        %s174 = smul.u32 4, %s173
        %p175 = scmp.lt.s32.totalorder %s174, 7
        %s176 = scalar_select %p175, %s174, 7
        %s177 = smul.addr %s176, 4
        %s178 = scalar_lea.vmem %s0, %s177
        %p179 = pneg %p51
        %p180 = pneg %p48
        %s181 = sand.u32 %s66, 1
        %s182 = scalar_lea.sflag [#allocation3], %s181
        %s183 = sand.u32 %s66, 1
        %s184 = smul.addr %s183, 256
        %s185 = scalar_lea.vmem [#allocation2], %s184
        %p186 = pneg %p79
        %p187 = pneg %p76
        %p188 = pneg %p105
        %p189 = pneg %p102
        %p190 = scmp.lt.s32.totalorder %s20, 1
        %s191 = scalar_select %p190, %s20, 1
        %s192 = smul.addr %s191, 8
        %s193 = scalar_lea.vmem %s2, %s192
        %s194 = sadd.s32 %s20, %s21
        %s195 = smul.u32 4, %s194
        %p196 = scmp.lt.s32.totalorder %s195, 7
        %s197 = scalar_select %p196, %s195, 7
        %s198 = smul.addr %s197, 4
        %s199 = scalar_lea.vmem %s0, %s198
        %s200 = sadd.s32 %s20, %s21
        %s201 = smul.u32 4, %s200
        %s202 = sadd.s32 %s20, %s21
        %s203 = smul.u32 64, %s202
        %p204 = scmp.lt.s32.totalorder %s20, 1
        %s205 = scalar_select %p204, %s20, 1
        %s206 = smul.addr %s205, 8
        %s207 = scalar_lea.vmem %s2, %s206
        %p209 = scmp.eq.s32.totalorder %s21, 0
        // Predicated region
        $region33: #{_forward_batch_impl.1} parent=27 // pred_check
          %p210 = pneg %p209
        $region34: #{_forward_batch_impl.1} parent=27 // pred_check_branch
          %212 = sbr.rel (%p210) target = $region36
        $region35: #{_forward_batch_impl.1} parent=27 // pred_region
          %213 = vst [vmem:[%s207] sm:$0xff] 0.0
        $region36: #{_forward_batch_impl.1} parent=27 // pred_fallthru
          _
        %v214 = vld [vmem:[%s207] sm:$0xff]
        %v215 = vld [vmem:[%s199] sm:$0xff]
        %v216 = vld [vmem:[%s199 + $0x8] sm:$0xff]
        %v217 = vld [vmem:[%s168] sm:$0xf]
        %v218 = vld [vmem:[%s168 + $0x4] sm:$0xf]
        %v219 = vld [vmem:[%s168 + $0x8] sm:$0xf]
        %v220 = vld [vmem:[%s168 + $0xc] sm:$0xf]
        %v221 = vld [vmem:[%s168 + $0x10] sm:$0xf]
        %v222 = vld [vmem:[%s168 + $0x14] sm:$0xf]
        %v223 = vld [vmem:[%s168 + $0x18] sm:$0xf]
        %v224 = vld [vmem:[%s168 + $0x1c] sm:$0xf]
        %v225 = vld [vmem:[%s168 + $0x20] sm:$0xf]
        %v226 = vld [vmem:[%s168 + $0x24] sm:$0xf]
        %v227 = vld [vmem:[%s168 + $0x28] sm:$0xf]
        %v228 = vld [vmem:[%s168 + $0x2c] sm:$0xf]
        %v229 = vld [vmem:[%s168 + $0x30] sm:$0xf]
        %v230 = vld [vmem:[%s168 + $0x34] sm:$0xf]
        %v231 = vld [vmem:[%s168 + $0x38] sm:$0xf]
        %v232 = vld [vmem:[%s168 + $0x3c] sm:$0xf]
        %v233 = vld [vmem:[%s168 + $0x40] sm:$0xf]
        %v234 = vld [vmem:[%s168 + $0x44] sm:$0xf]
        %v235 = vld [vmem:[%s168 + $0x48] sm:$0xf]
        %v236 = vld [vmem:[%s168 + $0x4c] sm:$0xf]
        %v237 = vld [vmem:[%s168 + $0x50] sm:$0xf]
        %v238 = vld [vmem:[%s168 + $0x54] sm:$0xf]
        %v239 = vld [vmem:[%s168 + $0x58] sm:$0xf]
        %v240 = vld [vmem:[%s168 + $0x5c] sm:$0xf]
        %v241 = vld [vmem:[%s168 + $0x60] sm:$0xf]
        %v242 = vld [vmem:[%s168 + $0x64] sm:$0xf]
        %v243 = vld [vmem:[%s168 + $0x68] sm:$0xf]
        %v244 = vld [vmem:[%s168 + $0x6c] sm:$0xf]
        %v245 = vld [vmem:[%s168 + $0x70] sm:$0xf]
        %v246 = vld [vmem:[%s168 + $0x74] sm:$0xf]
        %v247 = vld [vmem:[%s168 + $0x78] sm:$0xf]
        %v248 = vld [vmem:[%s168 + $0x7c] sm:$0xf]
        %v249 = vld [vmem:[%s168 + $0x80] sm:$0xf]
        %v250 = vld [vmem:[%s168 + $0x84] sm:$0xf]
        %v251 = vld [vmem:[%s168 + $0x88] sm:$0xf]
        %v252 = vld [vmem:[%s168 + $0x8c] sm:$0xf]
        %v253 = vld [vmem:[%s168 + $0x90] sm:$0xf]
        %v254 = vld [vmem:[%s168 + $0x94] sm:$0xf]
        %v255 = vld [vmem:[%s168 + $0x98] sm:$0xf]
        %v256 = vld [vmem:[%s168 + $0x9c] sm:$0xf]
        %v257 = vld [vmem:[%s168 + $0xa0] sm:$0xf]
        %v258 = vld [vmem:[%s168 + $0xa4] sm:$0xf]
        %v259 = vld [vmem:[%s168 + $0xa8] sm:$0xf]
        %v260 = vld [vmem:[%s168 + $0xac] sm:$0xf]
        %v261 = vld [vmem:[%s168 + $0xb0] sm:$0xf]
        %v262 = vld [vmem:[%s168 + $0xb4] sm:$0xf]
        %v263 = vld [vmem:[%s168 + $0xb8] sm:$0xf]
        %v264 = vld [vmem:[%s168 + $0xbc] sm:$0xf]
        %v265 = vld [vmem:[%s168 + $0xc0] sm:$0xf]
        %v266 = vld [vmem:[%s168 + $0xc4] sm:$0xf]
        %v267 = vld [vmem:[%s168 + $0xc8] sm:$0xf]
        %v268 = vld [vmem:[%s168 + $0xcc] sm:$0xf]
        %v269 = vld [vmem:[%s168 + $0xd0] sm:$0xf]
        %v270 = vld [vmem:[%s168 + $0xd4] sm:$0xf]
        %v271 = vld [vmem:[%s168 + $0xd8] sm:$0xf]
        %v272 = vld [vmem:[%s168 + $0xdc] sm:$0xf]
        %v273 = vld [vmem:[%s168 + $0xe0] sm:$0xf]
        %v274 = vld [vmem:[%s168 + $0xe4] sm:$0xf]
        %v275 = vld [vmem:[%s168 + $0xe8] sm:$0xf]
        %v276 = vld [vmem:[%s168 + $0xec] sm:$0xf]
        %v277 = vld [vmem:[%s168 + $0xf0] sm:$0xf]
        %v278 = vld [vmem:[%s168 + $0xf4] sm:$0xf]
        %v279 = vld [vmem:[%s168 + $0xf8] sm:$0xf]
        %v280 = vld [vmem:[%s168 + $0xfc] sm:$0xf]
        %v283 = vunpack.c.l.b16 %v215
        %v284 = vunpack.c.h.b16 %v215
        %v285 = vunpack.c.l.b16 %v216
        %v286 = vunpack.c.h.b16 %v216
        %v287 = vpack.c.b16 %v283, %v283
        %v288 = vpack.c.b16 %v284, %v284
        %v289 = vpack.c.b16 %v285, %v285
        %v290 = vpack.c.b16 %v286, %v286
        %v359 = vunpack.c.l.b16 %v217
        %v360 = vunpack.c.l.b16 %v218
        %v361 = vunpack.c.l.b16 %v219
        %v362 = vunpack.c.l.b16 %v220
        %v363 = vunpack.c.l.b16 %v221
        %v364 = vunpack.c.l.b16 %v222
        %v365 = vunpack.c.l.b16 %v223
        %v366 = vunpack.c.l.b16 %v224
        %v367 = vunpack.c.l.b16 %v225
        %v368 = vunpack.c.l.b16 %v226
        %v369 = vunpack.c.l.b16 %v227
        %v370 = vunpack.c.l.b16 %v228
        %v371 = vunpack.c.l.b16 %v229
        %v372 = vunpack.c.l.b16 %v230
        %v373 = vunpack.c.l.b16 %v231
        %v374 = vunpack.c.l.b16 %v232
        %v375 = vunpack.c.l.b16 %v233
        %v376 = vunpack.c.l.b16 %v234
        %v377 = vunpack.c.l.b16 %v235
        %v378 = vunpack.c.l.b16 %v236
        %v379 = vunpack.c.l.b16 %v237
        %v380 = vunpack.c.l.b16 %v238
        %v381 = vunpack.c.l.b16 %v239
        %v382 = vunpack.c.l.b16 %v240
        %v383 = vunpack.c.l.b16 %v241
        %v384 = vunpack.c.l.b16 %v242
        %v385 = vunpack.c.l.b16 %v243
        %v386 = vunpack.c.l.b16 %v244
        %v387 = vunpack.c.l.b16 %v245
        %v388 = vunpack.c.l.b16 %v246
        %v389 = vunpack.c.l.b16 %v247
        %v390 = vunpack.c.l.b16 %v248
        %v391 = vunpack.c.l.b16 %v249
        %v392 = vunpack.c.l.b16 %v250
        %v393 = vunpack.c.l.b16 %v251
        %v394 = vunpack.c.l.b16 %v252
        %v395 = vunpack.c.l.b16 %v253
        %v396 = vunpack.c.l.b16 %v254
        %v397 = vunpack.c.l.b16 %v255
        %v398 = vunpack.c.l.b16 %v256
        %v399 = vunpack.c.l.b16 %v257
        %v400 = vunpack.c.l.b16 %v258
        %v401 = vunpack.c.l.b16 %v259
        %v402 = vunpack.c.l.b16 %v260
        %v403 = vunpack.c.l.b16 %v261
        %v404 = vunpack.c.l.b16 %v262
        %v405 = vunpack.c.l.b16 %v263
        %v406 = vunpack.c.l.b16 %v264
        %v407 = vunpack.c.l.b16 %v265
        %v408 = vunpack.c.l.b16 %v266
        %v409 = vunpack.c.l.b16 %v267
        %v410 = vunpack.c.l.b16 %v268
        %v411 = vunpack.c.l.b16 %v269
        %v412 = vunpack.c.l.b16 %v270
        %v413 = vunpack.c.l.b16 %v271
        %v414 = vunpack.c.l.b16 %v272
        %v415 = vunpack.c.l.b16 %v273
        %v416 = vunpack.c.l.b16 %v274
        %v417 = vunpack.c.l.b16 %v275
        %v418 = vunpack.c.l.b16 %v276
        %v419 = vunpack.c.l.b16 %v277
        %v420 = vunpack.c.l.b16 %v278
        %v421 = vunpack.c.l.b16 %v279
        %v422 = vunpack.c.l.b16 %v280
        %v423 = vpack.c.b16 %v360, %v359
        %v424 = vpack.c.b16 %v362, %v361
        %v425 = vpack.c.b16 %v364, %v363
        %v426 = vpack.c.b16 %v366, %v365
        %v427 = vpack.c.b16 %v368, %v367
        %v428 = vpack.c.b16 %v370, %v369
        %v429 = vpack.c.b16 %v372, %v371
        %v430 = vpack.c.b16 %v374, %v373
        %v431 = vpack.c.b16 %v376, %v375
        %v432 = vpack.c.b16 %v378, %v377
        %v433 = vpack.c.b16 %v380, %v379
        %v434 = vpack.c.b16 %v382, %v381
        %v435 = vpack.c.b16 %v384, %v383
        %v436 = vpack.c.b16 %v386, %v385
        %v437 = vpack.c.b16 %v388, %v387
        %v438 = vpack.c.b16 %v390, %v389
        %v439 = vpack.c.b16 %v392, %v391
        %v440 = vpack.c.b16 %v394, %v393
        %v441 = vpack.c.b16 %v396, %v395
        %v442 = vpack.c.b16 %v398, %v397
        %v443 = vpack.c.b16 %v400, %v399
        %v444 = vpack.c.b16 %v402, %v401
        %v445 = vpack.c.b16 %v404, %v403
        %v446 = vpack.c.b16 %v406, %v405
        %v447 = vpack.c.b16 %v408, %v407
        %v448 = vpack.c.b16 %v410, %v409
        %v449 = vpack.c.b16 %v412, %v411
        %v450 = vpack.c.b16 %v414, %v413
        %v451 = vpack.c.b16 %v416, %v415
        %v452 = vpack.c.b16 %v418, %v417
        %v453 = vpack.c.b16 %v420, %v419
        %v454 = vpack.c.b16 %v422, %v421
        %487 = vmatprep.subr.bf16.mxu0 0
        %488 = vmatpush1.bf16.msra.mxu0 %v430
        %489 = vmatprep.subr.bf16.mxu0 0
        %490 = vmatpush1.bf16.msra.mxu0 %v429
        %491 = vmatprep.subr.bf16.mxu0 0
        %492 = vmatpush1.bf16.msra.mxu0 %v428
        %493 = vmatprep.subr.bf16.mxu0 0
        %494 = vmatpush1.bf16.msra.mxu0 %v427
        %495 = vmatprep.subr.bf16.mxu0 0
        %496 = vmatpush1.bf16.msra.mxu0 %v426
        %497 = vmatprep.subr.bf16.mxu0 0
        %498 = vmatpush1.bf16.msra.mxu0 %v425
        %499 = vmatprep.subr.bf16.mxu0 0
        %500 = vmatpush1.bf16.msra.mxu0 %v424
        %501 = vmatprep.subr.bf16.mxu0 0
        %502 = vmatpush1.bf16.msra.mxu0 %v423
        %503 = vmatprep.subr.bf16.mxu0 0
        %504 = vmatpush2.bf16.msra.mxu0 %v438
        %505 = vmatprep.subr.bf16.mxu0 0
        %506 = vmatpush2.bf16.msra.mxu0 %v437
        %507 = vmatprep.subr.bf16.mxu0 0
        %508 = vmatpush2.bf16.msra.mxu0 %v436
        %509 = vmatprep.subr.bf16.mxu0 0
        %510 = vmatpush2.bf16.msra.mxu0 %v435
        %511 = vmatprep.subr.bf16.mxu0 0
        %512 = vmatpush2.bf16.msra.mxu0 %v434
        %513 = vmatprep.subr.bf16.mxu0 0
        %514 = vmatpush2.bf16.msra.mxu0 %v433
        %515 = vmatprep.subr.bf16.mxu0 0
        %516 = vmatpush2.bf16.msra.mxu0 %v432
        %517 = vmatprep.subr.bf16.mxu0 0
        %518 = vmatpush2.bf16.msra.mxu0 %v431
        %519 = vmatprep.mubr.bf16.mxu0 %v288
        %520 = vmatmul.mubr.bf16.gmra.mxu0 %v287
        %v521 = vpop.f32.mrf.mxu0
        %v522 = vadd.f32 0.0, %v521
        %v523 = vpop.f32.mrf.mxu0
        %v524 = vpop.f32.mrf.mxu0
        %v525 = vpop.f32.mrf.mxu0
        %526 = vdwg.mxu0
        %527 = vmatprep.subr.bf16.mxu0 0
        %528 = vmatpush1.bf16.msra.mxu0 %v446
        %529 = vmatprep.subr.bf16.mxu0 0
        %530 = vmatpush1.bf16.msra.mxu0 %v445
        %531 = vmatprep.subr.bf16.mxu0 0
        %532 = vmatpush1.bf16.msra.mxu0 %v444
        %533 = vmatprep.subr.bf16.mxu0 0
        %534 = vmatpush1.bf16.msra.mxu0 %v443
        %535 = vmatprep.subr.bf16.mxu0 0
        %536 = vmatpush1.bf16.msra.mxu0 %v442
        %537 = vmatprep.subr.bf16.mxu0 0
        %538 = vmatpush1.bf16.msra.mxu0 %v441
        %539 = vmatprep.subr.bf16.mxu0 0
        %540 = vmatpush1.bf16.msra.mxu0 %v440
        %541 = vmatprep.subr.bf16.mxu0 0
        %542 = vmatpush1.bf16.msra.mxu0 %v439
        %543 = vmatprep.subr.bf16.mxu0 0
        %544 = vmatpush2.bf16.msra.mxu0 %v454
        %545 = vmatprep.subr.bf16.mxu0 0
        %546 = vmatpush2.bf16.msra.mxu0 %v453
        %547 = vmatprep.subr.bf16.mxu0 0
        %548 = vmatpush2.bf16.msra.mxu0 %v452
        %549 = vmatprep.subr.bf16.mxu0 0
        %550 = vmatpush2.bf16.msra.mxu0 %v451
        %551 = vmatprep.subr.bf16.mxu0 0
        %552 = vmatpush2.bf16.msra.mxu0 %v450
        %553 = vmatprep.subr.bf16.mxu0 0
        %554 = vmatpush2.bf16.msra.mxu0 %v449
        %555 = vmatprep.subr.bf16.mxu0 0
        %556 = vmatpush2.bf16.msra.mxu0 %v448
        %557 = vmatprep.subr.bf16.mxu0 0
        %558 = vmatpush2.bf16.msra.mxu0 %v447
        %559 = vmatprep.mubr.bf16.mxu0 %v290
        %560 = vmatmul.mubr.bf16.gmra.mxu0 %v289
        %v561 = vpop.f32.mrf.mxu0
        %v562 = vadd.f32 %v522, %v561
        %v563 = vpop.f32.mrf.mxu0
        %v564 = vpop.f32.mrf.mxu0
        %v565 = vpop.f32.mrf.mxu0
        %566 = vdwg.mxu0
        %v567 = vadd.f32 %v214, %v562
        %568 = vst [vmem:[%s207] sm:$0xff] %v567
        %p569 = scmp.lt.s32.totalorder %s20, 1
        %s570 = scalar_select %p569, %s20, 1
        %s571 = smul.addr %s570, 8
        %s572 = scalar_lea.vmem %s2, %s571
        // Predicated region
        $region37: #{_forward_batch_impl.1} parent=27 // pred_check
          %p573 = pneg %p102
        $region38: #{_forward_batch_impl.1} parent=27 // pred_check_branch
          %575 = sbr.rel (%p573) target = $region40
        $region39: #{_forward_batch_impl.1} parent=27 // pred_region
          _
        $region40: #{_forward_batch_impl.1} parent=27 // pred_fallthru
          _
      $region28: #{_forward_batch_impl.1} parent=5 // pred_fallthru
        _
      %p576 = scmp.le.s32.totalorder 2, %s11
      // Predicated region
      $region41: #{_forward_batch_impl.1} parent=5 // pred_check
        %p577 = pneg %p576
      $region42: #{_forward_batch_impl.1} parent=5 // pred_check_branch
        %579 = sbr.rel (%p577) target = $region44
      $region43: #{_forward_batch_impl.1} parent=5 // pred_region
        %s580 = ssub.s32 %s11, 2
        // Predicated region
        $region45: #{_forward_batch_impl.1} parent=43 // pred_check
          %p581 = pneg %p108
        $region46: #{_forward_batch_impl.1} parent=43 // pred_check_branch
          %583 = sbr.rel (%p581) target = $region48
        $region47: #{_forward_batch_impl.1} parent=43 // pred_region
          %p584 = scmp.lt.s32.totalorder %s22, 1
          %s585 = scalar_select %p584, %s22, 1
          %s586 = smul.addr %s585, 8
          %s587 = scalar_lea.vmem %s2, %s586
        $region48: #{_forward_batch_impl.1} parent=43 // pred_fallthru
          _
      $region44: #{_forward_batch_impl.1} parent=5 // pred_fallthru
        _
    $region6: #{_forward_batch_impl.1} parent=1 // loop_footer
      %s15 = sadd.s32 1, %s11
    $region7: #{_forward_batch_impl.1} parent=1 // loop_footer_branch
      %10 = sbr.rel target = $region3
    $region8: #{_forward_batch_impl.1} parent=1 // loop_exit
      _
    %588 = vsyncpa [#allocation3], 1
    %s589 = scalar_lea.sflag [#allocation3], 1
    %590 = vsyncpa %s589, 1

</llo_original>
